<compile_context>
chip_gen: v6e
topology: v6e:2x2x1
jax: 0.10.0
libtpu: 0.0.40
codegen_flags: <defaults>
</compile_context>

<pallas_src>
import jax
import jax.numpy as jnp
from jax.experimental import pallas as pl
from jax.experimental.pallas import tpu as pltpu

LANE = 128


def _round_up(n, m):
    return ((n + m - 1) // m) * m


def _make_fused_kernel(num_layers, hidden_size):
    """Builds the fused multi-layer LSTM-cell kernel (layer loop unrolled)."""
    H = hidden_size

    def kernel(*refs):
        # inputs: x, then per layer (h, c, w_stacked, bias); outputs: per layer (new_h, new_c)
        n_in = 1 + 4 * num_layers
        in_refs, out_refs = refs[:n_in], refs[n_in:]

        x = in_refs[0][...].astype(jnp.float32)
        for l in range(num_layers):
            h_ref, c_ref, w_ref, b_ref = in_refs[1 + 4 * l: 1 + 4 * (l + 1)]
            nh_ref, nc_ref = out_refs[2 * l], out_refs[2 * l + 1]

            h = h_ref[...].astype(jnp.float32)
            c = c_ref[...]  # f32 cell state

            # Single fused MXU matmul: [x | h] @ [W_ih ; W_hh]  (bf16 in, f32 acc).
            xh = jnp.concatenate([x, h], axis=-1).astype(jnp.bfloat16)
            gates = jnp.dot(xh, w_ref[...], preferred_element_type=jnp.float32)
            gates = gates + b_ref[...]  # (1, 4H) f32 bias, broadcast over sublanes

            # Gate order [i, f, o, g]: one contiguous sigmoid stream + trailing tanh.
            ifo = jax.nn.sigmoid(gates[:, : 3 * H])
            g_gate = jnp.tanh(gates[:, 3 * H:])
            i_gate = ifo[:, :H]
            f_gate = ifo[:, H: 2 * H]
            o_gate = ifo[:, 2 * H:]

            c_new = f_gate * c + i_gate * g_gate
            h_new = o_gate * jnp.tanh(c_new)

            nc_ref[...] = c_new                      # keep c in f32
            nh_ref[...] = h_new.astype(nh_ref.dtype)

            # dropout(p=0.0) between layers is the identity (eval-mode semantics).
            x = h_new

    return kernel


def multi_layer_lstm_cell_forward(x, states, params):
    """Mirrors MultiLayerLSTMCell.forward with one fused pallas_call.

    x:       (batch, input_size) activations
    states:  list of (h, c) per layer, each (batch, hidden_size); c kept in f32
    params:  list of (w_stacked_bf16, bias_f32) per layer from prepare_params()
    returns: (final_output, new_states)
    """
    num_layers = len(params)
    B = x.shape[0]
    H = states[0][0].shape[-1]
    in_pad = params[0][0].shape[0] - H  # padded input width of layer 0

    x_p = x
    if x.shape[-1] < in_pad:
        x_p = jnp.pad(x, ((0, 0), (0, in_pad - x.shape[-1])))

    vmem = pl.BlockSpec(memory_space=pltpu.MemorySpace.VMEM)

    inputs = [x_p]
    in_specs = [vmem]
    out_shapes = []
    out_specs = []
    aliases = {}
    for l, ((h, c), (w, b)) in enumerate(zip(states, params)):
        inputs += [h, c.astype(jnp.float32), w, b]
        in_specs += [vmem, vmem, vmem, vmem]
        out_shapes += [jax.ShapeDtypeStruct((B, H), h.dtype),
                       jax.ShapeDtypeStruct((B, H), jnp.float32)]
        out_specs += [vmem, vmem]
        aliases[1 + 4 * l] = 2 * l       # h_l -> new_h_l
        aliases[2 + 4 * l] = 2 * l + 1   # c_l -> new_c_l

    outs = pl.pallas_call(
        _make_fused_kernel(num_layers, H),
        out_shape=tuple(out_shapes),
        in_specs=in_specs,
        out_specs=tuple(out_specs),
        input_output_aliases=aliases,
    )(*inputs)

    new_states = [(outs[2 * l], outs[2 * l + 1]) for l in range(num_layers)]
    return new_states[-1][0], new_states


# ---------------------------------------------------------------------------
# Parameter handling
# ---------------------------------------------------------------------------

def init_pytorch_params(key, input_size, hidden_size, num_layers, dtype=jnp.float32):
    """PyTorch nn.LSTMCell layout: w_ih (4H, in), w_hh (4H, H), b_ih (4H,), b_hh (4H,).
    Gate order [i, f, g, o]; init U(-1/sqrt(H), 1/sqrt(H))."""
    params = []
    bound = 1.0 / (hidden_size ** 0.5)
    in_size = input_size
    for _ in range(num_layers):
        key, k1, k2, k3, k4 = jax.random.split(key, 5)
        w_ih = jax.random.uniform(k1, (4 * hidden_size, in_size), dtype, -bound, bound)
        w_hh = jax.random.uniform(k2, (4 * hidden_size, hidden_size), dtype, -bound, bound)
        b_ih = jax.random.uniform(k3, (4 * hidden_size,), dtype, -bound, bound)
        b_hh = jax.random.uniform(k4, (4 * hidden_size,), dtype, -bound, bound)
        params.append((w_ih, w_hh, b_ih, b_hh))
        in_size = hidden_size
    return params


def prepare_params(pt_params, hidden_size):
    """Convert PyTorch-layout params to the kernel layout:
       - stack [W_ih^T ; W_hh^T] into one (in_pad + H, 4H) matrix (input rows
         zero-padded to a multiple of 128 lanes for layer 0),
       - permute gate columns [i, f, g, o] -> [i, f, o, g],
       - cast weights to bf16; fused bias stays f32 with shape (1, 4H)."""
    H = hidden_size
    perm = jnp.concatenate([jnp.arange(0, 2 * H),
                            jnp.arange(3 * H, 4 * H),
                            jnp.arange(2 * H, 3 * H)])
    prepared = []
    for (w_ih, w_hh, b_ih, b_hh) in pt_params:
        in_size = w_ih.shape[1]
        in_pad = _round_up(in_size, LANE)
        w_ih_t = w_ih.T  # (in, 4H)
        if in_pad != in_size:
            w_ih_t = jnp.pad(w_ih_t, ((0, in_pad - in_size), (0, 0)))
        w = jnp.concatenate([w_ih_t, w_hh.T], axis=0)   # (in_pad + H, 4H)
        w = w[:, perm].astype(jnp.bfloat16)
        b = (b_ih + b_hh)[perm].astype(jnp.float32).reshape(1, 4 * H)
        prepared.append((w, b))
    return prepared


# ---------------------------------------------------------------------------
# Pure-JAX reference (PyTorch gate order, same bf16-weight / f32-acc numerics)
# ---------------------------------------------------------------------------

def _ref_forward(x, states, pt_params):
    H = states[0][0].shape[-1]
    new_states = []
    for (h, c), (w_ih, w_hh, b_ih, b_hh) in zip(states, pt_params):
        w = jnp.concatenate([w_ih.T, w_hh.T], axis=0).astype(jnp.bfloat16)
        xh = jnp.concatenate([x, h], axis=-1).astype(jnp.bfloat16)
        gates = jnp.dot(xh, w, preferred_element_type=jnp.float32) + (b_ih + b_hh)
        i = jax.nn.sigmoid(gates[:, 0 * H:1 * H])
        f = jax.nn.sigmoid(gates[:, 1 * H:2 * H])
        g = jnp.tanh(gates[:, 2 * H:3 * H])
        o = jax.nn.sigmoid(gates[:, 3 * H:4 * H])
        c_new = f * c + i * g
        h_new = o * jnp.tanh(c_new)
        new_states.append((h_new, c_new))
        x = h_new
    return x, new_states


if __name__ == "__main__":
    batch = 8
    input_size = 64
    hidden_size = 128
    num_layers = 2
    # dropout = 0.0 (eval-mode) -> identity between layers.

    key = jax.random.PRNGKey(0)
    key, kx, kh, kc, kp = jax.random.split(key, 5)

    x = jax.random.normal(kx, (batch, input_size), jnp.float32)
    states = []
    hkeys = jax.random.split(kh, num_layers)
    ckeys = jax.random.split(kc, num_layers)
    for i in range(num_layers):
        h = jax.random.normal(hkeys[i], (batch, hidden_size), jnp.float32)
        c = jax.random.normal(ckeys[i], (batch, hidden_size), jnp.float32)
        states.append((h, c))

    pt_params = init_pytorch_params(kp, input_size, hidden_size, num_layers)
    kernel_params = prepare_params(pt_params, hidden_size)

    fwd = jax.jit(multi_layer_lstm_cell_forward)
    out, new_states = fwd(x, states, kernel_params)
    out = jax.block_until_ready(out)
    new_states = jax.block_until_ready(new_states)

    # Correctness check against a pure-JAX reference using PyTorch gate order.
    ref_out, ref_states = _ref_forward(x, states, pt_params)
    assert jnp.allclose(out, ref_out, atol=1e-3, rtol=1e-3)
    for (h_k, c_k), (h_r, c_r) in zip(new_states, ref_states):
        assert jnp.allclose(h_k, h_r, atol=1e-3, rtol=1e-3)
        assert jnp.allclose(c_k, c_r, atol=1e-3, rtol=1e-3)

    print("KERNEL_OK")
</pallas_src>

<mosaic_0001>
module attributes {stable_mosaic.version = 11 : i64} {
  func.func @kernel(%arg0: memref<8x128xf32, #tpu.memory_space<vmem>>, %arg1: memref<8x128xf32, #tpu.memory_space<vmem>>, %arg2: memref<8x128xf32, #tpu.memory_space<vmem>>, %arg3: memref<256x512xbf16, #tpu.memory_space<vmem>>, %arg4: memref<1x512xf32, #tpu.memory_space<vmem>>, %arg5: memref<8x128xf32, #tpu.memory_space<vmem>>, %arg6: memref<8x128xf32, #tpu.memory_space<vmem>>, %arg7: memref<256x512xbf16, #tpu.memory_space<vmem>>, %arg8: memref<1x512xf32, #tpu.memory_space<vmem>>, %arg9: memref<8x128xf32, #tpu.memory_space<vmem>>, %arg10: memref<8x128xf32, #tpu.memory_space<vmem>>, %arg11: memref<8x128xf32, #tpu.memory_space<vmem>>, %arg12: memref<8x128xf32, #tpu.memory_space<vmem>>) attributes {dimension_semantics = [], scalar_prefetch = 0 : i64, scratch_operands = 0 : i64, tpu.core_type = #tpu.core_type<tc>} {
    %c0 = arith.constant 0 : index
    %c0_0 = arith.constant 0 : index
    %0 = vector.load %arg0[%c0, %c0_0] : memref<8x128xf32, #tpu.memory_space<vmem>>, vector<8x128xf32>
    %c0_1 = arith.constant 0 : index
    %c0_2 = arith.constant 0 : index
    %1 = vector.load %arg1[%c0_1, %c0_2] : memref<8x128xf32, #tpu.memory_space<vmem>>, vector<8x128xf32>
    %c0_3 = arith.constant 0 : index
    %c0_4 = arith.constant 0 : index
    %2 = vector.load %arg2[%c0_3, %c0_4] : memref<8x128xf32, #tpu.memory_space<vmem>>, vector<8x128xf32>
    %3 = tpu.concatenate %0, %1 in 1 : vector<8x128xf32>, vector<8x128xf32> -> vector<8x256xf32>
    %4 = arith.truncf %3 : vector<8x256xf32> to vector<8x256xbf16>
    %c0_5 = arith.constant 0 : index
    %c0_6 = arith.constant 0 : index
    %5 = vector.load %arg3[%c0_5, %c0_6] : memref<256x512xbf16, #tpu.memory_space<vmem>>, vector<256x512xbf16>
    %cst = arith.constant dense<0.000000e+00> : vector<8x512xf32>
    %6 = tpu.matmul %4, %5, %cst {dimension_numbers = #tpu.dot_dimension_numbers<[1], [0], [0], [1], [0, 0, 1, 1], [], []>} : vector<8x256xbf16>, vector<256x512xbf16>, vector<8x512xf32> -> vector<8x512xf32>
    %c0_7 = arith.constant 0 : index
    %c0_8 = arith.constant 0 : index
    %7 = vector.load %arg4[%c0_7, %c0_8] : memref<1x512xf32, #tpu.memory_space<vmem>>, vector<1x512xf32>
    %8 = vector.broadcast %7 : vector<1x512xf32> to vector<8x512xf32>
    %9 = arith.addf %6, %8 : vector<8x512xf32>
    %10 = vector.extract_strided_slice %9 {offsets = [0, 0], sizes = [8, 384], strides = [1, 1]} : vector<8x512xf32> to vector<8x384xf32>
    %11 = arith.negf %10 : vector<8x384xf32>
    %12 = math.exp %11 : vector<8x384xf32>
    %cst_9 = arith.constant 1.000000e+00 : f32
    %13 = vector.broadcast %cst_9 : f32 to vector<8x384xf32>
    %14 = arith.addf %13, %12 : vector<8x384xf32>
    %15 = arith.divf %13, %14 : vector<8x384xf32>
    %16 = vector.extract_strided_slice %9 {offsets = [0, 384], sizes = [8, 128], strides = [1, 1]} : vector<8x512xf32> to vector<8x128xf32>
    %17 = math.tanh %16 : vector<8x128xf32>
    %18 = vector.extract_strided_slice %15 {offsets = [0, 0], sizes = [8, 128], strides = [1, 1]} : vector<8x384xf32> to vector<8x128xf32>
    %19 = vector.extract_strided_slice %15 {offsets = [0, 128], sizes = [8, 128], strides = [1, 1]} : vector<8x384xf32> to vector<8x128xf32>
    %20 = vector.extract_strided_slice %15 {offsets = [0, 256], sizes = [8, 128], strides = [1, 1]} : vector<8x384xf32> to vector<8x128xf32>
    %21 = arith.mulf %19, %2 : vector<8x128xf32>
    %22 = arith.mulf %18, %17 : vector<8x128xf32>
    %23 = arith.addf %21, %22 : vector<8x128xf32>
    %24 = math.tanh %23 : vector<8x128xf32>
    %25 = arith.mulf %20, %24 : vector<8x128xf32>
    %c0_10 = arith.constant 0 : index
    %c0_11 = arith.constant 0 : index
    %26 = vector.load %arg10[%c0_10, %c0_11] : memref<8x128xf32, #tpu.memory_space<vmem>>, vector<8x128xf32>
    tpu.vector_store %arg10[%c0_10, %c0_11], %23 {strides = array<i32>} : memref<8x128xf32, #tpu.memory_space<vmem>>, vector<8x128xf32>,
    %c0_12 = arith.constant 0 : index
    %c0_13 = arith.constant 0 : index
    %27 = vector.load %arg9[%c0_12, %c0_13] : memref<8x128xf32, #tpu.memory_space<vmem>>, vector<8x128xf32>
    tpu.vector_store %arg9[%c0_12, %c0_13], %25 {strides = array<i32>} : memref<8x128xf32, #tpu.memory_space<vmem>>, vector<8x128xf32>,
    %c0_14 = arith.constant 0 : index
    %c0_15 = arith.constant 0 : index
    %28 = vector.load %arg5[%c0_14, %c0_15] : memref<8x128xf32, #tpu.memory_space<vmem>>, vector<8x128xf32>
    %c0_16 = arith.constant 0 : index
    %c0_17 = arith.constant 0 : index
    %29 = vector.load %arg6[%c0_16, %c0_17] : memref<8x128xf32, #tpu.memory_space<vmem>>, vector<8x128xf32>
    %30 = tpu.concatenate %25, %28 in 1 : vector<8x128xf32>, vector<8x128xf32> -> vector<8x256xf32>
    %31 = arith.truncf %30 : vector<8x256xf32> to vector<8x256xbf16>
    %c0_18 = arith.constant 0 : index
    %c0_19 = arith.constant 0 : index
    %32 = vector.load %arg7[%c0_18, %c0_19] : memref<256x512xbf16, #tpu.memory_space<vmem>>, vector<256x512xbf16>
    %cst_20 = arith.constant dense<0.000000e+00> : vector<8x512xf32>
    %33 = tpu.matmul %31, %32, %cst_20 {dimension_numbers = #tpu.dot_dimension_numbers<[1], [0], [0], [1], [0, 0, 1, 1], [], []>} : vector<8x256xbf16>, vector<256x512xbf16>, vector<8x512xf32> -> vector<8x512xf32>
    %c0_21 = arith.constant 0 : index
    %c0_22 = arith.constant 0 : index
    %34 = vector.load %arg8[%c0_21, %c0_22] : memref<1x512xf32, #tpu.memory_space<vmem>>, vector<1x512xf32>
    %35 = vector.broadcast %34 : vector<1x512xf32> to vector<8x512xf32>
    %36 = arith.addf %33, %35 : vector<8x512xf32>
    %37 = vector.extract_strided_slice %36 {offsets = [0, 0], sizes = [8, 384], strides = [1, 1]} : vector<8x512xf32> to vector<8x384xf32>
    %38 = arith.negf %37 : vector<8x384xf32>
    %39 = math.exp %38 : vector<8x384xf32>
    %cst_23 = arith.constant 1.000000e+00 : f32
    %40 = vector.broadcast %cst_23 : f32 to vector<8x384xf32>
    %41 = arith.addf %40, %39 : vector<8x384xf32>
    %42 = arith.divf %40, %41 : vector<8x384xf32>
    %43 = vector.extract_strided_slice %36 {offsets = [0, 384], sizes = [8, 128], strides = [1, 1]} : vector<8x512xf32> to vector<8x128xf32>
    %44 = math.tanh %43 : vector<8x128xf32>
    %45 = vector.extract_strided_slice %42 {offsets = [0, 0], sizes = [8, 128], strides = [1, 1]} : vector<8x384xf32> to vector<8x128xf32>
    %46 = vector.extract_strided_slice %42 {offsets = [0, 128], sizes = [8, 128], strides = [1, 1]} : vector<8x384xf32> to vector<8x128xf32>
    %47 = vector.extract_strided_slice %42 {offsets = [0, 256], sizes = [8, 128], strides = [1, 1]} : vector<8x384xf32> to vector<8x128xf32>
    %48 = arith.mulf %46, %29 : vector<8x128xf32>
    %49 = arith.mulf %45, %44 : vector<8x128xf32>
    %50 = arith.addf %48, %49 : vector<8x128xf32>
    %51 = math.tanh %50 : vector<8x128xf32>
    %52 = arith.mulf %47, %51 : vector<8x128xf32>
    %c0_24 = arith.constant 0 : index
    %c0_25 = arith.constant 0 : index
    %53 = vector.load %arg12[%c0_24, %c0_25] : memref<8x128xf32, #tpu.memory_space<vmem>>, vector<8x128xf32>
    tpu.vector_store %arg12[%c0_24, %c0_25], %50 {strides = array<i32>} : memref<8x128xf32, #tpu.memory_space<vmem>>, vector<8x128xf32>,
    %c0_26 = arith.constant 0 : index
    %c0_27 = arith.constant 0 : index
    %54 = vector.load %arg11[%c0_26, %c0_27] : memref<8x128xf32, #tpu.memory_space<vmem>>, vector<8x128xf32>
    tpu.vector_store %arg11[%c0_26, %c0_27], %52 {strides = array<i32>} : memref<8x128xf32, #tpu.memory_space<vmem>>, vector<8x128xf32>,
    return
  }
}

</mosaic_0001>

<llo_original>
// kernel: multi_layer_lstm_cell_forward.1
$region0: #{multi_layer_lstm_cell_forward.1}
  #allocation0 [shape = 'u32[]', space=smem, size = 0x4, offset = 0x4, fixed_abs, tag = 'smem constant byte address 0x4 - core index']
  #allocation1 [shape = 'u32[144,128]{1,0:T(1,128)}', space=vmem, size = 0x12000, scoped, tag = 'internal scratch']
  %s0 = inlined_call_operand.vmem [shape: f32[8,128], index: 0, kind: input, shape index: {}]
  %s1 = inlined_call_operand.vmem [shape: f32[8,128], index: 1, kind: input, shape index: {}, may-alias: {1,9}]
  %s2 = inlined_call_operand.vmem [shape: f32[8,128], index: 2, kind: input, shape index: {}, may-alias: {2,10}]
  %s3 = inlined_call_operand.hbm [shape: bf16[256,512], index: 3, kind: input, shape index: {}]
  %s4 = inlined_call_operand.vmem [shape: f32[1,512], index: 4, kind: input, shape index: {}]
  %s5 = inlined_call_operand.vmem [shape: f32[8,128], index: 5, kind: input, shape index: {}, may-alias: {5,11}]
  %s6 = inlined_call_operand.vmem [shape: f32[8,128], index: 6, kind: input, shape index: {}, may-alias: {6,12}]
  %s7 = inlined_call_operand.hbm [shape: bf16[256,512], index: 7, kind: input, shape index: {}]
  %s8 = inlined_call_operand.vmem [shape: f32[1,512], index: 8, kind: input, shape index: {}]
  %s9 = inlined_call_operand.vmem [shape: f32[8,128], index: 9, kind: output, shape index: {0}, may-alias: {1,9}]
  %s10 = inlined_call_operand.vmem [shape: f32[8,128], index: 10, kind: output, shape index: {1}, may-alias: {2,10}]
  %s11 = inlined_call_operand.vmem [shape: f32[8,128], index: 11, kind: output, shape index: {2}, may-alias: {5,11}]
  %s12 = inlined_call_operand.vmem [shape: f32[8,128], index: 12, kind: output, shape index: {3}, may-alias: {6,12}]
  %13 = xla_tuple %s9, %s10, %s11, %s12
  %s14 = sld [smem:[#allocation0]]
  $region78: #{multi_layer_lstm_cell_forward.1} parent=0
    _
  %s16 = ssub.s32 1, %s14
  %s17 = scalar_select 0, %s16, %s14
  $region1: #{multi_layer_lstm_cell_forward.1} parent=0
    #allocation2 [shape = 'u8[262144]{0}', space=vmem, size = 0x40000, scoped, tag = 'input window, operand 3, single buffered']
    #allocation3 [shape = 's32[1]{0}', space=sflag, size = 0x4, scoped, tag = 'scoped memory for multi_layer_lstm_cell_forward.1']
    #allocation4 [shape = 'u8[262144]{0}', space=vmem, size = 0x40000, scoped, tag = 'input window, operand 7, single buffered']
    #allocation5 [shape = 's32[1]{0}', space=sflag, size = 0x4, scoped, tag = 'scoped memory for multi_layer_lstm_cell_forward.1']
    %18 = vsyncpa [#allocation3], 0
    %19 = vsyncpa [#allocation5], 0
    // Predicated region
    $region2: #{multi_layer_lstm_cell_forward.1} parent=1 // pred_check
      _
    $region3: #{multi_layer_lstm_cell_forward.1} parent=1 // pred_check_branch
      %21 = sbr.rel (0) target = $region5
    $region4: #{multi_layer_lstm_cell_forward.1} parent=1 // pred_region
      _
    $region5: #{multi_layer_lstm_cell_forward.1} parent=1 // pred_fallthru
      _
    // Predicated region
    $region6: #{multi_layer_lstm_cell_forward.1} parent=1 // pred_check
      _
    $region7: #{multi_layer_lstm_cell_forward.1} parent=1 // pred_check_branch
      %23 = sbr.rel (0) target = $region9
    $region8: #{multi_layer_lstm_cell_forward.1} parent=1 // pred_region
      _
    $region9: #{multi_layer_lstm_cell_forward.1} parent=1 // pred_fallthru
      _
    // Predicated region
    $region10: #{multi_layer_lstm_cell_forward.1} parent=1 // pred_check
      _
    $region11: #{multi_layer_lstm_cell_forward.1} parent=1 // pred_check_branch
      %25 = sbr.rel (0) target = $region13
    $region12: #{multi_layer_lstm_cell_forward.1} parent=1 // pred_region
      _
    $region13: #{multi_layer_lstm_cell_forward.1} parent=1 // pred_fallthru
      _
    // Predicated region
    $region14: #{multi_layer_lstm_cell_forward.1} parent=1 // pred_check
      _
    $region15: #{multi_layer_lstm_cell_forward.1} parent=1 // pred_check_branch
      %27 = sbr.rel (0) target = $region17
    $region16: #{multi_layer_lstm_cell_forward.1} parent=1 // pred_region
      %s29 = ssub.s32 8192, 8192
      %30 = vsyncadd [#allocation3], %s29
      %s31 = sshll.u32 [#allocation2], 4
      %s32 = int_to_ptr.vmem [resolvable:$true] %s31
      %37 = dma.hbm_to_vmem [thread:$0]  %s3, 8192, %s32, [#allocation3], 256, 256, 16
    $region17: #{multi_layer_lstm_cell_forward.1} parent=1 // pred_fallthru
      _
    // Predicated region
    $region18: #{multi_layer_lstm_cell_forward.1} parent=1 // pred_check
      _
    $region19: #{multi_layer_lstm_cell_forward.1} parent=1 // pred_check_branch
      %39 = sbr.rel (0) target = $region21
    $region20: #{multi_layer_lstm_cell_forward.1} parent=1 // pred_region
      _
    $region21: #{multi_layer_lstm_cell_forward.1} parent=1 // pred_fallthru
      _
    // Predicated region
    $region22: #{multi_layer_lstm_cell_forward.1} parent=1 // pred_check
      _
    $region23: #{multi_layer_lstm_cell_forward.1} parent=1 // pred_check_branch
      %41 = sbr.rel (0) target = $region25
    $region24: #{multi_layer_lstm_cell_forward.1} parent=1 // pred_region
      _
    $region25: #{multi_layer_lstm_cell_forward.1} parent=1 // pred_fallthru
      _
    // Predicated region
    $region26: #{multi_layer_lstm_cell_forward.1} parent=1 // pred_check
      _
    $region27: #{multi_layer_lstm_cell_forward.1} parent=1 // pred_check_branch
      %43 = sbr.rel (0) target = $region29
    $region28: #{multi_layer_lstm_cell_forward.1} parent=1 // pred_region
      _
    $region29: #{multi_layer_lstm_cell_forward.1} parent=1 // pred_fallthru
      _
    // Predicated region
    $region30: #{multi_layer_lstm_cell_forward.1} parent=1 // pred_check
      _
    $region31: #{multi_layer_lstm_cell_forward.1} parent=1 // pred_check_branch
      %45 = sbr.rel (0) target = $region33
    $region32: #{multi_layer_lstm_cell_forward.1} parent=1 // pred_region
      %s47 = ssub.s32 8192, 8192
      %48 = vsyncadd [#allocation5], %s47
      %s49 = sshll.u32 [#allocation4], 4
      %s50 = int_to_ptr.vmem [resolvable:$true] %s49
      %55 = dma.hbm_to_vmem [thread:$0]  %s7, 8192, %s50, [#allocation5], 256, 256, 16
    $region33: #{multi_layer_lstm_cell_forward.1} parent=1 // pred_fallthru
      _
    // Predicated region
    $region34: #{multi_layer_lstm_cell_forward.1} parent=1 // pred_check
      _
    $region35: #{multi_layer_lstm_cell_forward.1} parent=1 // pred_check_branch
      %57 = sbr.rel (0) target = $region37
    $region36: #{multi_layer_lstm_cell_forward.1} parent=1 // pred_region
      _
    $region37: #{multi_layer_lstm_cell_forward.1} parent=1 // pred_fallthru
      _
    // Predicated region
    $region38: #{multi_layer_lstm_cell_forward.1} parent=1 // pred_check
      _
    $region39: #{multi_layer_lstm_cell_forward.1} parent=1 // pred_check_branch
      %59 = sbr.rel (0) target = $region41
    $region40: #{multi_layer_lstm_cell_forward.1} parent=1 // pred_region
      %60 = dma.done [#allocation3], 8192
    $region41: #{multi_layer_lstm_cell_forward.1} parent=1 // pred_fallthru
      _
    // Predicated region
    $region42: #{multi_layer_lstm_cell_forward.1} parent=1 // pred_check
      _
    $region43: #{multi_layer_lstm_cell_forward.1} parent=1 // pred_check_branch
      %62 = sbr.rel (0) target = $region45
    $region44: #{multi_layer_lstm_cell_forward.1} parent=1 // pred_region
      %63 = dma.done [#allocation5], 8192
    $region45: #{multi_layer_lstm_cell_forward.1} parent=1 // pred_fallthru
      _
    %v64 = vld [vmem:[%s0] sm:$0xff]
    %v65 = vld [vmem:[%s1] sm:$0xff]
    %v66 = vld [vmem:[%s2] sm:$0xff]
    %v67 = vpack.c.bf16 %v64, %v64
    %v68 = vpack.c.bf16 %v65, %v65
    %v69 = vld [vmem:[#allocation2] sm:$0xff]
    %v70 = vld [vmem:[#allocation2 + $0x8] sm:$0xff]
    %v71 = vld [vmem:[#allocation2 + $0x10] sm:$0xff]
    %v72 = vld [vmem:[#allocation2 + $0x18] sm:$0xff]
    %v73 = vld [vmem:[#allocation2 + $0x20] sm:$0xff]
    %v74 = vld [vmem:[#allocation2 + $0x28] sm:$0xff]
    %v75 = vld [vmem:[#allocation2 + $0x30] sm:$0xff]
    %v76 = vld [vmem:[#allocation2 + $0x38] sm:$0xff]
    %v77 = vld [vmem:[#allocation2 + $0x40] sm:$0xff]
    %v78 = vld [vmem:[#allocation2 + $0x48] sm:$0xff]
    %v79 = vld [vmem:[#allocation2 + $0x50] sm:$0xff]
    %v80 = vld [vmem:[#allocation2 + $0x58] sm:$0xff]
    %v81 = vld [vmem:[#allocation2 + $0x60] sm:$0xff]
    %v82 = vld [vmem:[#allocation2 + $0x68] sm:$0xff]
    %v83 = vld [vmem:[#allocation2 + $0x70] sm:$0xff]
    %v84 = vld [vmem:[#allocation2 + $0x78] sm:$0xff]
    %v85 = vld [vmem:[#allocation2 + $0x80] sm:$0xff]
    %v86 = vld [vmem:[#allocation2 + $0x88] sm:$0xff]
    %v87 = vld [vmem:[#allocation2 + $0x90] sm:$0xff]
    %v88 = vld [vmem:[#allocation2 + $0x98] sm:$0xff]
    %v89 = vld [vmem:[#allocation2 + $0xa0] sm:$0xff]
    %v90 = vld [vmem:[#allocation2 + $0xa8] sm:$0xff]
    %v91 = vld [vmem:[#allocation2 + $0xb0] sm:$0xff]
    %v92 = vld [vmem:[#allocation2 + $0xb8] sm:$0xff]
    %v93 = vld [vmem:[#allocation2 + $0xc0] sm:$0xff]
    %v94 = vld [vmem:[#allocation2 + $0xc8] sm:$0xff]
    %v95 = vld [vmem:[#allocation2 + $0xd0] sm:$0xff]
    %v96 = vld [vmem:[#allocation2 + $0xd8] sm:$0xff]
    %v97 = vld [vmem:[#allocation2 + $0xe0] sm:$0xff]
    %v98 = vld [vmem:[#allocation2 + $0xe8] sm:$0xff]
    %v99 = vld [vmem:[#allocation2 + $0xf0] sm:$0xff]
    %v100 = vld [vmem:[#allocation2 + $0xf8] sm:$0xff]
    %v101 = vld [vmem:[#allocation2 + $0x100] sm:$0xff]
    %v102 = vld [vmem:[#allocation2 + $0x108] sm:$0xff]
    %v103 = vld [vmem:[#allocation2 + $0x110] sm:$0xff]
    %v104 = vld [vmem:[#allocation2 + $0x118] sm:$0xff]
    %v105 = vld [vmem:[#allocation2 + $0x120] sm:$0xff]
    %v106 = vld [vmem:[#allocation2 + $0x128] sm:$0xff]
    %v107 = vld [vmem:[#allocation2 + $0x130] sm:$0xff]
    %v108 = vld [vmem:[#allocation2 + $0x138] sm:$0xff]
    %v109 = vld [vmem:[#allocation2 + $0x140] sm:$0xff]
    %v110 = vld [vmem:[#allocation2 + $0x148] sm:$0xff]
    %v111 = vld [vmem:[#allocation2 + $0x150] sm:$0xff]
    %v112 = vld [vmem:[#allocation2 + $0x158] sm:$0xff]
    %v113 = vld [vmem:[#allocation2 + $0x160] sm:$0xff]
    %v114 = vld [vmem:[#allocation2 + $0x168] sm:$0xff]
    %v115 = vld [vmem:[#allocation2 + $0x170] sm:$0xff]
    %v116 = vld [vmem:[#allocation2 + $0x178] sm:$0xff]
    %v117 = vld [vmem:[#allocation2 + $0x180] sm:$0xff]
    %v118 = vld [vmem:[#allocation2 + $0x188] sm:$0xff]
    %v119 = vld [vmem:[#allocation2 + $0x190] sm:$0xff]
    %v120 = vld [vmem:[#allocation2 + $0x198] sm:$0xff]
    %v121 = vld [vmem:[#allocation2 + $0x1a0] sm:$0xff]
    %v122 = vld [vmem:[#allocation2 + $0x1a8] sm:$0xff]
    %v123 = vld [vmem:[#allocation2 + $0x1b0] sm:$0xff]
    %v124 = vld [vmem:[#allocation2 + $0x1b8] sm:$0xff]
    %v125 = vld [vmem:[#allocation2 + $0x1c0] sm:$0xff]
    %v126 = vld [vmem:[#allocation2 + $0x1c8] sm:$0xff]
    %v127 = vld [vmem:[#allocation2 + $0x1d0] sm:$0xff]
    %v128 = vld [vmem:[#allocation2 + $0x1d8] sm:$0xff]
    %v129 = vld [vmem:[#allocation2 + $0x1e0] sm:$0xff]
    %v130 = vld [vmem:[#allocation2 + $0x1e8] sm:$0xff]
    %v131 = vld [vmem:[#allocation2 + $0x1f0] sm:$0xff]
    %v132 = vld [vmem:[#allocation2 + $0x1f8] sm:$0xff]
    %v133 = vld [vmem:[%s4] sm:$0xf]
    %v135 = vlaneseq
    %v136 = vshrl.u32 %v135, 7
    %v137 = vsub.s32 0, %v136
    %v138 = vrot.slane %v133, %v137
    %v139 = vlaneseq
    %v140 = vshrl.u32 %v139, 7
    %v141 = vsub.s32 1, %v140
    %v142 = vrot.slane %v133, %v141
    %v143 = vlaneseq
    %v144 = vshrl.u32 %v143, 7
    %v145 = vsub.s32 2, %v144
    %v146 = vrot.slane %v133, %v145
    %v147 = vlaneseq
    %v148 = vshrl.u32 %v147, 7
    %v149 = vsub.s32 3, %v148
    %v150 = vrot.slane %v133, %v149
    %v219 = vunpack.c.l.b16 %v69
    %v220 = vunpack.c.h.b16 %v69
    %v221 = vunpack.c.l.b16 %v70
    %v222 = vunpack.c.h.b16 %v70
    %v223 = vunpack.c.l.b16 %v71
    %v224 = vunpack.c.h.b16 %v71
    %v225 = vunpack.c.l.b16 %v72
    %v226 = vunpack.c.h.b16 %v72
    %v227 = vunpack.c.l.b16 %v73
    %v228 = vunpack.c.h.b16 %v73
    %v229 = vunpack.c.l.b16 %v74
    %v230 = vunpack.c.h.b16 %v74
    %v231 = vunpack.c.l.b16 %v75
    %v232 = vunpack.c.h.b16 %v75
    %v233 = vunpack.c.l.b16 %v76
    %v234 = vunpack.c.h.b16 %v76
    %v235 = vunpack.c.l.b16 %v77
    %v236 = vunpack.c.h.b16 %v77
    %v237 = vunpack.c.l.b16 %v78
    %v238 = vunpack.c.h.b16 %v78
    %v239 = vunpack.c.l.b16 %v79
    %v240 = vunpack.c.h.b16 %v79
    %v241 = vunpack.c.l.b16 %v80
    %v242 = vunpack.c.h.b16 %v80
    %v243 = vunpack.c.l.b16 %v81
    %v244 = vunpack.c.h.b16 %v81
    %v245 = vunpack.c.l.b16 %v82
    %v246 = vunpack.c.h.b16 %v82
    %v247 = vunpack.c.l.b16 %v83
    %v248 = vunpack.c.h.b16 %v83
    %v249 = vunpack.c.l.b16 %v84
    %v250 = vunpack.c.h.b16 %v84
    %v251 = vunpack.c.l.b16 %v85
    %v252 = vunpack.c.h.b16 %v85
    %v253 = vunpack.c.l.b16 %v86
    %v254 = vunpack.c.h.b16 %v86
    %v255 = vunpack.c.l.b16 %v87
    %v256 = vunpack.c.h.b16 %v87
    %v257 = vunpack.c.l.b16 %v88
    %v258 = vunpack.c.h.b16 %v88
    %v259 = vunpack.c.l.b16 %v89
    %v260 = vunpack.c.h.b16 %v89
    %v261 = vunpack.c.l.b16 %v90
    %v262 = vunpack.c.h.b16 %v90
    %v263 = vunpack.c.l.b16 %v91
    %v264 = vunpack.c.h.b16 %v91
    %v265 = vunpack.c.l.b16 %v92
    %v266 = vunpack.c.h.b16 %v92
    %v267 = vunpack.c.l.b16 %v93
    %v268 = vunpack.c.h.b16 %v93
    %v269 = vunpack.c.l.b16 %v94
    %v270 = vunpack.c.h.b16 %v94
    %v271 = vunpack.c.l.b16 %v95
    %v272 = vunpack.c.h.b16 %v95
    %v273 = vunpack.c.l.b16 %v96
    %v274 = vunpack.c.h.b16 %v96
    %v275 = vunpack.c.l.b16 %v97
    %v276 = vunpack.c.h.b16 %v97
    %v277 = vunpack.c.l.b16 %v98
    %v278 = vunpack.c.h.b16 %v98
    %v279 = vunpack.c.l.b16 %v99
    %v280 = vunpack.c.h.b16 %v99
    %v281 = vunpack.c.l.b16 %v100
    %v282 = vunpack.c.h.b16 %v100
    %v283 = vunpack.c.l.b16 %v101
    %v284 = vunpack.c.h.b16 %v101
    %v285 = vunpack.c.l.b16 %v102
    %v286 = vunpack.c.h.b16 %v102
    %v287 = vunpack.c.l.b16 %v103
    %v288 = vunpack.c.h.b16 %v103
    %v289 = vunpack.c.l.b16 %v104
    %v290 = vunpack.c.h.b16 %v104
    %v291 = vunpack.c.l.b16 %v105
    %v292 = vunpack.c.h.b16 %v105
    %v293 = vunpack.c.l.b16 %v106
    %v294 = vunpack.c.h.b16 %v106
    %v295 = vunpack.c.l.b16 %v107
    %v296 = vunpack.c.h.b16 %v107
    %v297 = vunpack.c.l.b16 %v108
    %v298 = vunpack.c.h.b16 %v108
    %v299 = vunpack.c.l.b16 %v109
    %v300 = vunpack.c.h.b16 %v109
    %v301 = vunpack.c.l.b16 %v110
    %v302 = vunpack.c.h.b16 %v110
    %v303 = vunpack.c.l.b16 %v111
    %v304 = vunpack.c.h.b16 %v111
    %v305 = vunpack.c.l.b16 %v112
    %v306 = vunpack.c.h.b16 %v112
    %v307 = vunpack.c.l.b16 %v113
    %v308 = vunpack.c.h.b16 %v113
    %v309 = vunpack.c.l.b16 %v114
    %v310 = vunpack.c.h.b16 %v114
    %v311 = vunpack.c.l.b16 %v115
    %v312 = vunpack.c.h.b16 %v115
    %v313 = vunpack.c.l.b16 %v116
    %v314 = vunpack.c.h.b16 %v116
    %v315 = vunpack.c.l.b16 %v117
    %v316 = vunpack.c.h.b16 %v117
    %v317 = vunpack.c.l.b16 %v118
    %v318 = vunpack.c.h.b16 %v118
    %v319 = vunpack.c.l.b16 %v119
    %v320 = vunpack.c.h.b16 %v119
    %v321 = vunpack.c.l.b16 %v120
    %v322 = vunpack.c.h.b16 %v120
    %v323 = vunpack.c.l.b16 %v121
    %v324 = vunpack.c.h.b16 %v121
    %v325 = vunpack.c.l.b16 %v122
    %v326 = vunpack.c.h.b16 %v122
    %v327 = vunpack.c.l.b16 %v123
    %v328 = vunpack.c.h.b16 %v123
    %v329 = vunpack.c.l.b16 %v124
    %v330 = vunpack.c.h.b16 %v124
    %v331 = vunpack.c.l.b16 %v125
    %v332 = vunpack.c.h.b16 %v125
    %v333 = vunpack.c.l.b16 %v126
    %v334 = vunpack.c.h.b16 %v126
    %v335 = vunpack.c.l.b16 %v127
    %v336 = vunpack.c.h.b16 %v127
    %v337 = vunpack.c.l.b16 %v128
    %v338 = vunpack.c.h.b16 %v128
    %v339 = vunpack.c.l.b16 %v129
    %v340 = vunpack.c.h.b16 %v129
    %v341 = vunpack.c.l.b16 %v130
    %v342 = vunpack.c.h.b16 %v130
    %v343 = vunpack.c.l.b16 %v131
    %v344 = vunpack.c.h.b16 %v131
    %v345 = vunpack.c.l.b16 %v132
    %v346 = vunpack.c.h.b16 %v132
    %v347 = vpack.c.b16 %v223, %v219
    %v348 = vpack.c.b16 %v224, %v220
    %v349 = vpack.c.b16 %v225, %v221
    %v350 = vpack.c.b16 %v226, %v222
    %v351 = vpack.c.b16 %v231, %v227
    %v352 = vpack.c.b16 %v232, %v228
    %v353 = vpack.c.b16 %v233, %v229
    %v354 = vpack.c.b16 %v234, %v230
    %v355 = vpack.c.b16 %v239, %v235
    %v356 = vpack.c.b16 %v240, %v236
    %v357 = vpack.c.b16 %v241, %v237
    %v358 = vpack.c.b16 %v242, %v238
    %v359 = vpack.c.b16 %v247, %v243
    %v360 = vpack.c.b16 %v248, %v244
    %v361 = vpack.c.b16 %v249, %v245
    %v362 = vpack.c.b16 %v250, %v246
    %v363 = vpack.c.b16 %v255, %v251
    %v364 = vpack.c.b16 %v256, %v252
    %v365 = vpack.c.b16 %v257, %v253
    %v366 = vpack.c.b16 %v258, %v254
    %v367 = vpack.c.b16 %v263, %v259
    %v368 = vpack.c.b16 %v264, %v260
    %v369 = vpack.c.b16 %v265, %v261
    %v370 = vpack.c.b16 %v266, %v262
    %v371 = vpack.c.b16 %v271, %v267
    %v372 = vpack.c.b16 %v272, %v268
    %v373 = vpack.c.b16 %v273, %v269
    %v374 = vpack.c.b16 %v274, %v270
    %v375 = vpack.c.b16 %v279, %v275
    %v376 = vpack.c.b16 %v280, %v276
    %v377 = vpack.c.b16 %v281, %v277
    %v378 = vpack.c.b16 %v282, %v278
    %v379 = vpack.c.b16 %v287, %v283
    %v380 = vpack.c.b16 %v288, %v284
    %v381 = vpack.c.b16 %v289, %v285
    %v382 = vpack.c.b16 %v290, %v286
    %v383 = vpack.c.b16 %v295, %v291
    %v384 = vpack.c.b16 %v296, %v292
    %v385 = vpack.c.b16 %v297, %v293
    %v386 = vpack.c.b16 %v298, %v294
    %v387 = vpack.c.b16 %v303, %v299
    %v388 = vpack.c.b16 %v304, %v300
    %v389 = vpack.c.b16 %v305, %v301
    %v390 = vpack.c.b16 %v306, %v302
    %v391 = vpack.c.b16 %v311, %v307
    %v392 = vpack.c.b16 %v312, %v308
    %v393 = vpack.c.b16 %v313, %v309
    %v394 = vpack.c.b16 %v314, %v310
    %v395 = vpack.c.b16 %v319, %v315
    %v396 = vpack.c.b16 %v320, %v316
    %v397 = vpack.c.b16 %v321, %v317
    %v398 = vpack.c.b16 %v322, %v318
    %v399 = vpack.c.b16 %v327, %v323
    %v400 = vpack.c.b16 %v328, %v324
    %v401 = vpack.c.b16 %v329, %v325
    %v402 = vpack.c.b16 %v330, %v326
    %v403 = vpack.c.b16 %v335, %v331
    %v404 = vpack.c.b16 %v336, %v332
    %v405 = vpack.c.b16 %v337, %v333
    %v406 = vpack.c.b16 %v338, %v334
    %v407 = vpack.c.b16 %v343, %v339
    %v408 = vpack.c.b16 %v344, %v340
    %v409 = vpack.c.b16 %v345, %v341
    %v410 = vpack.c.b16 %v346, %v342
    %475 = vmatprep.subr.bf16.mxu0 %v376
    %476 = vmatpush1.bf16.msra.mxu0 %v375
    %477 = vmatprep.subr.bf16.mxu0 %v372
    %478 = vmatpush1.bf16.msra.mxu0 %v371
    %479 = vmatprep.subr.bf16.mxu0 %v368
    %480 = vmatpush1.bf16.msra.mxu0 %v367
    %481 = vmatprep.subr.bf16.mxu0 %v364
    %482 = vmatpush1.bf16.msra.mxu0 %v363
    %483 = vmatprep.subr.bf16.mxu0 %v360
    %484 = vmatpush1.bf16.msra.mxu0 %v359
    %485 = vmatprep.subr.bf16.mxu0 %v356
    %486 = vmatpush1.bf16.msra.mxu0 %v355
    %487 = vmatprep.subr.bf16.mxu0 %v352
    %488 = vmatpush1.bf16.msra.mxu0 %v351
    %489 = vmatprep.subr.bf16.mxu0 %v348
    %490 = vmatpush1.bf16.msra.mxu0 %v347
    %491 = vmatprep.subr.bf16.mxu0 %v408
    %492 = vmatpush2.bf16.msra.mxu0 %v407
    %493 = vmatprep.subr.bf16.mxu0 %v404
    %494 = vmatpush2.bf16.msra.mxu0 %v403
    %495 = vmatprep.subr.bf16.mxu0 %v400
    %496 = vmatpush2.bf16.msra.mxu0 %v399
    %497 = vmatprep.subr.bf16.mxu0 %v396
    %498 = vmatpush2.bf16.msra.mxu0 %v395
    %499 = vmatprep.subr.bf16.mxu0 %v392
    %500 = vmatpush2.bf16.msra.mxu0 %v391
    %501 = vmatprep.subr.bf16.mxu0 %v388
    %502 = vmatpush2.bf16.msra.mxu0 %v387
    %503 = vmatprep.subr.bf16.mxu0 %v384
    %504 = vmatpush2.bf16.msra.mxu0 %v383
    %505 = vmatprep.subr.bf16.mxu0 %v380
    %506 = vmatpush2.bf16.msra.mxu0 %v379
    %507 = vmatprep.mubr.bf16.mxu0 %v68
    %508 = vmatmul.mubr.bf16.gmra.mxu0 %v67
    %v509 = vpop.f32.mrf.mxu0
    %v510 = vadd.f32 %v138, %v509
    %v511 = vpop.f32.mrf.mxu0
    %v512 = vadd.f32 %v142, %v511
    %v513 = vpop.f32.mrf.mxu0
    %v514 = vpop.f32.mrf.mxu0
    %515 = vdwg.mxu0
    %516 = vmatprep.subr.bf16.mxu0 %v378
    %517 = vmatpush1.bf16.msra.mxu0 %v377
    %518 = vmatprep.subr.bf16.mxu0 %v374
    %519 = vmatpush1.bf16.msra.mxu0 %v373
    %520 = vmatprep.subr.bf16.mxu0 %v370
    %521 = vmatpush1.bf16.msra.mxu0 %v369
    %522 = vmatprep.subr.bf16.mxu0 %v366
    %523 = vmatpush1.bf16.msra.mxu0 %v365
    %524 = vmatprep.subr.bf16.mxu0 %v362
    %525 = vmatpush1.bf16.msra.mxu0 %v361
    %526 = vmatprep.subr.bf16.mxu0 %v358
    %527 = vmatpush1.bf16.msra.mxu0 %v357
    %528 = vmatprep.subr.bf16.mxu0 %v354
    %529 = vmatpush1.bf16.msra.mxu0 %v353
    %530 = vmatprep.subr.bf16.mxu0 %v350
    %531 = vmatpush1.bf16.msra.mxu0 %v349
    %532 = vmatprep.subr.bf16.mxu0 %v410
    %533 = vmatpush2.bf16.msra.mxu0 %v409
    %534 = vmatprep.subr.bf16.mxu0 %v406
    %535 = vmatpush2.bf16.msra.mxu0 %v405
    %536 = vmatprep.subr.bf16.mxu0 %v402
    %537 = vmatpush2.bf16.msra.mxu0 %v401
    %538 = vmatprep.subr.bf16.mxu0 %v398
    %539 = vmatpush2.bf16.msra.mxu0 %v397
    %540 = vmatprep.subr.bf16.mxu0 %v394
    %541 = vmatpush2.bf16.msra.mxu0 %v393
    %542 = vmatprep.subr.bf16.mxu0 %v390
    %543 = vmatpush2.bf16.msra.mxu0 %v389
    %544 = vmatprep.subr.bf16.mxu0 %v386
    %545 = vmatpush2.bf16.msra.mxu0 %v385
    %546 = vmatprep.subr.bf16.mxu0 %v382
    %547 = vmatpush2.bf16.msra.mxu0 %v381
    %548 = vmatprep.mubr.bf16.mxu0 %v68
    %549 = vmatmul.mubr.bf16.gmra.mxu0 %v67
    %v550 = vpop.f32.mrf.mxu0
    %v551 = vadd.f32 %v146, %v550
    %v552 = vpop.f32.mrf.mxu0
    %v553 = vadd.f32 %v150, %v552
    %v554 = vpop.f32.mrf.mxu0
    %v555 = vpop.f32.mrf.mxu0
    %556 = vdwg.mxu0
    %v557 = vxor.u32 %v510, 2147483648
    %v558 = vxor.u32 %v512, 2147483648
    %v559 = vxor.u32 %v551, 2147483648
    %v560 = vmul.f32 %v557, 1.442695
    %v561 = vpow.pop %v560
    %v562 = vmul.f32 %v558, 1.442695
    %v563 = vpow.pop %v562
    %v564 = vmul.f32 %v559, 1.442695
    %v565 = vpow.pop %v564
    %v566 = vadd.f32 %v561, 1.0
    %v567 = vadd.f32 %v563, 1.0
    %v568 = vadd.f32 %v565, 1.0
    %v569 = vrcp.pop %v566
    %v570 = vmul.f32 1.0, %v569
    %v571 = vrcp.pop %v567
    %v572 = vmul.f32 1.0, %v571
    %v573 = vrcp.pop %v568
    %v574 = vmul.f32 1.0, %v573
    %v575 = vtanh.pop %v553
    %v576 = vmul.f32 %v572, %v66
    %v577 = vmul.f32 %v570, %v575
    %v578 = vadd.f32 %v576, %v577
    %v579 = vtanh.pop %v578
    %v580 = vmul.f32 %v574, %v579
    %581 = vst [vmem:[%s10] sm:$0xff] %v578
    %582 = vst [vmem:[%s9] sm:$0xff] %v580
    %v583 = vld [vmem:[%s5] sm:$0xff]
    %v584 = vld [vmem:[%s6] sm:$0xff]
    %v585 = vpack.c.bf16 %v580, %v580
    %v586 = vpack.c.bf16 %v583, %v583
    %v587 = vld [vmem:[#allocation4] sm:$0xff]
    %v588 = vld [vmem:[#allocation4 + $0x8] sm:$0xff]
    %v589 = vld [vmem:[#allocation4 + $0x10] sm:$0xff]
    %v590 = vld [vmem:[#allocation4 + $0x18] sm:$0xff]
    %v591 = vld [vmem:[#allocation4 + $0x20] sm:$0xff]
    %v592 = vld [vmem:[#allocation4 + $0x28] sm:$0xff]
    %v593 = vld [vmem:[#allocation4 + $0x30] sm:$0xff]
    %v594 = vld [vmem:[#allocation4 + $0x38] sm:$0xff]
    %v595 = vld [vmem:[#allocation4 + $0x40] sm:$0xff]
    %v596 = vld [vmem:[#allocation4 + $0x48] sm:$0xff]
    %v597 = vld [vmem:[#allocation4 + $0x50] sm:$0xff]
    %v598 = vld [vmem:[#allocation4 + $0x58] sm:$0xff]
    %v599 = vld [vmem:[#allocation4 + $0x60] sm:$0xff]
    %v600 = vld [vmem:[#allocation4 + $0x68] sm:$0xff]
    %v601 = vld [vmem:[#allocation4 + $0x70] sm:$0xff]
    %v602 = vld [vmem:[#allocation4 + $0x78] sm:$0xff]
    %v603 = vld [vmem:[#allocation4 + $0x80] sm:$0xff]
    %v604 = vld [vmem:[#allocation4 + $0x88] sm:$0xff]
    %v605 = vld [vmem:[#allocation4 + $0x90] sm:$0xff]
    %v606 = vld [vmem:[#allocation4 + $0x98] sm:$0xff]
    %v607 = vld [vmem:[#allocation4 + $0xa0] sm:$0xff]
    %v608 = vld [vmem:[#allocation4 + $0xa8] sm:$0xff]
    %v609 = vld [vmem:[#allocation4 + $0xb0] sm:$0xff]
    %v610 = vld [vmem:[#allocation4 + $0xb8] sm:$0xff]
    %v611 = vld [vmem:[#allocation4 + $0xc0] sm:$0xff]
    %v612 = vld [vmem:[#allocation4 + $0xc8] sm:$0xff]
    %v613 = vld [vmem:[#allocation4 + $0xd0] sm:$0xff]
    %v614 = vld [vmem:[#allocation4 + $0xd8] sm:$0xff]
    %v615 = vld [vmem:[#allocation4 + $0xe0] sm:$0xff]
    %v616 = vld [vmem:[#allocation4 + $0xe8] sm:$0xff]
    %v617 = vld [vmem:[#allocation4 + $0xf0] sm:$0xff]
    %v618 = vld [vmem:[#allocation4 + $0xf8] sm:$0xff]
    %v619 = vld [vmem:[#allocation4 + $0x100] sm:$0xff]
    %v620 = vld [vmem:[#allocation4 + $0x108] sm:$0xff]
    %v621 = vld [vmem:[#allocation4 + $0x110] sm:$0xff]
    %v622 = vld [vmem:[#allocation4 + $0x118] sm:$0xff]
    %v623 = vld [vmem:[#allocation4 + $0x120] sm:$0xff]
    %v624 = vld [vmem:[#allocation4 + $0x128] sm:$0xff]
    %v625 = vld [vmem:[#allocation4 + $0x130] sm:$0xff]
    %v626 = vld [vmem:[#allocation4 + $0x138] sm:$0xff]
    %v627 = vld [vmem:[#allocation4 + $0x140] sm:$0xff]
    %v628 = vld [vmem:[#allocation4 + $0x148] sm:$0xff]
    %v629 = vld [vmem:[#allocation4 + $0x150] sm:$0xff]
    %v630 = vld [vmem:[#allocation4 + $0x158] sm:$0xff]
    %v631 = vld [vmem:[#allocation4 + $0x160] sm:$0xff]
    %v632 = vld [vmem:[#allocation4 + $0x168] sm:$0xff]
    %v633 = vld [vmem:[#allocation4 + $0x170] sm:$0xff]
    %v634 = vld [vmem:[#allocation4 + $0x178] sm:$0xff]
    %v635 = vld [vmem:[#allocation4 + $0x180] sm:$0xff]
    %v636 = vld [vmem:[#allocation4 + $0x188] sm:$0xff]
    %v637 = vld [vmem:[#allocation4 + $0x190] sm:$0xff]
    %v638 = vld [vmem:[#allocation4 + $0x198] sm:$0xff]
    %v639 = vld [vmem:[#allocation4 + $0x1a0] sm:$0xff]
    %v640 = vld [vmem:[#allocation4 + $0x1a8] sm:$0xff]
    %v641 = vld [vmem:[#allocation4 + $0x1b0] sm:$0xff]
    %v642 = vld [vmem:[#allocation4 + $0x1b8] sm:$0xff]
    %v643 = vld [vmem:[#allocation4 + $0x1c0] sm:$0xff]
    %v644 = vld [vmem:[#allocation4 + $0x1c8] sm:$0xff]
    %v645 = vld [vmem:[#allocation4 + $0x1d0] sm:$0xff]
    %v646 = vld [vmem:[#allocation4 + $0x1d8] sm:$0xff]
    %v647 = vld [vmem:[#allocation4 + $0x1e0] sm:$0xff]
    %v648 = vld [vmem:[#allocation4 + $0x1e8] sm:$0xff]
    %v649 = vld [vmem:[#allocation4 + $0x1f0] sm:$0xff]
    %v650 = vld [vmem:[#allocation4 + $0x1f8] sm:$0xff]
    %v651 = vld [vmem:[%s8] sm:$0xf]
    %v653 = vlaneseq
    %v654 = vshrl.u32 %v653, 7
    %v655 = vsub.s32 0, %v654
    %v656 = vrot.slane %v651, %v655
    %v657 = vlaneseq
    %v658 = vshrl.u32 %v657, 7
    %v659 = vsub.s32 1, %v658
    %v660 = vrot.slane %v651, %v659
    %v661 = vlaneseq
    %v662 = vshrl.u32 %v661, 7
    %v663 = vsub.s32 2, %v662
    %v664 = vrot.slane %v651, %v663
    %v665 = vlaneseq
    %v666 = vshrl.u32 %v665, 7
    %v667 = vsub.s32 3, %v666
    %v668 = vrot.slane %v651, %v667
    %v737 = vunpack.c.l.b16 %v587
    %v738 = vunpack.c.h.b16 %v587
    %v739 = vunpack.c.l.b16 %v588
    %v740 = vunpack.c.h.b16 %v588
    %v741 = vunpack.c.l.b16 %v589
    %v742 = vunpack.c.h.b16 %v589
    %v743 = vunpack.c.l.b16 %v590
    %v744 = vunpack.c.h.b16 %v590
    %v745 = vunpack.c.l.b16 %v591
    %v746 = vunpack.c.h.b16 %v591
    %v747 = vunpack.c.l.b16 %v592
    %v748 = vunpack.c.h.b16 %v592
    %v749 = vunpack.c.l.b16 %v593
    %v750 = vunpack.c.h.b16 %v593
    %v751 = vunpack.c.l.b16 %v594
    %v752 = vunpack.c.h.b16 %v594
    %v753 = vunpack.c.l.b16 %v595
    %v754 = vunpack.c.h.b16 %v595
    %v755 = vunpack.c.l.b16 %v596
    %v756 = vunpack.c.h.b16 %v596
    %v757 = vunpack.c.l.b16 %v597
    %v758 = vunpack.c.h.b16 %v597
    %v759 = vunpack.c.l.b16 %v598
    %v760 = vunpack.c.h.b16 %v598
    %v761 = vunpack.c.l.b16 %v599
    %v762 = vunpack.c.h.b16 %v599
    %v763 = vunpack.c.l.b16 %v600
    %v764 = vunpack.c.h.b16 %v600
    %v765 = vunpack.c.l.b16 %v601
    %v766 = vunpack.c.h.b16 %v601
    %v767 = vunpack.c.l.b16 %v602
    %v768 = vunpack.c.h.b16 %v602
    %v769 = vunpack.c.l.b16 %v603
    %v770 = vunpack.c.h.b16 %v603
    %v771 = vunpack.c.l.b16 %v604
    %v772 = vunpack.c.h.b16 %v604
    %v773 = vunpack.c.l.b16 %v605
    %v774 = vunpack.c.h.b16 %v605
    %v775 = vunpack.c.l.b16 %v606
    %v776 = vunpack.c.h.b16 %v606
    %v777 = vunpack.c.l.b16 %v607
    %v778 = vunpack.c.h.b16 %v607
    %v779 = vunpack.c.l.b16 %v608
    %v780 = vunpack.c.h.b16 %v608
    %v781 = vunpack.c.l.b16 %v609
    %v782 = vunpack.c.h.b16 %v609
    %v783 = vunpack.c.l.b16 %v610
    %v784 = vunpack.c.h.b16 %v610
    %v785 = vunpack.c.l.b16 %v611
    %v786 = vunpack.c.h.b16 %v611
    %v787 = vunpack.c.l.b16 %v612
    %v788 = vunpack.c.h.b16 %v612
    %v789 = vunpack.c.l.b16 %v613
    %v790 = vunpack.c.h.b16 %v613
    %v791 = vunpack.c.l.b16 %v614
    %v792 = vunpack.c.h.b16 %v614
    %v793 = vunpack.c.l.b16 %v615
    %v794 = vunpack.c.h.b16 %v615
    %v795 = vunpack.c.l.b16 %v616
    %v796 = vunpack.c.h.b16 %v616
    %v797 = vunpack.c.l.b16 %v617
    %v798 = vunpack.c.h.b16 %v617
    %v799 = vunpack.c.l.b16 %v618
    %v800 = vunpack.c.h.b16 %v618
    %v801 = vunpack.c.l.b16 %v619
    %v802 = vunpack.c.h.b16 %v619
    %v803 = vunpack.c.l.b16 %v620
    %v804 = vunpack.c.h.b16 %v620
    %v805 = vunpack.c.l.b16 %v621
    %v806 = vunpack.c.h.b16 %v621
    %v807 = vunpack.c.l.b16 %v622
    %v808 = vunpack.c.h.b16 %v622
    %v809 = vunpack.c.l.b16 %v623
    %v810 = vunpack.c.h.b16 %v623
    %v811 = vunpack.c.l.b16 %v624
    %v812 = vunpack.c.h.b16 %v624
    %v813 = vunpack.c.l.b16 %v625
    %v814 = vunpack.c.h.b16 %v625
    %v815 = vunpack.c.l.b16 %v626
    %v816 = vunpack.c.h.b16 %v626
    %v817 = vunpack.c.l.b16 %v627
    %v818 = vunpack.c.h.b16 %v627
    %v819 = vunpack.c.l.b16 %v628
    %v820 = vunpack.c.h.b16 %v628
    %v821 = vunpack.c.l.b16 %v629
    %v822 = vunpack.c.h.b16 %v629
    %v823 = vunpack.c.l.b16 %v630
    %v824 = vunpack.c.h.b16 %v630
    %v825 = vunpack.c.l.b16 %v631
    %v826 = vunpack.c.h.b16 %v631
    %v827 = vunpack.c.l.b16 %v632
    %v828 = vunpack.c.h.b16 %v632
    %v829 = vunpack.c.l.b16 %v633
    %v830 = vunpack.c.h.b16 %v633
    %v831 = vunpack.c.l.b16 %v634
    %v832 = vunpack.c.h.b16 %v634
    %v833 = vunpack.c.l.b16 %v635
    %v834 = vunpack.c.h.b16 %v635
    %v835 = vunpack.c.l.b16 %v636
    %v836 = vunpack.c.h.b16 %v636
    %v837 = vunpack.c.l.b16 %v637
    %v838 = vunpack.c.h.b16 %v637
    %v839 = vunpack.c.l.b16 %v638
    %v840 = vunpack.c.h.b16 %v638
    %v841 = vunpack.c.l.b16 %v639
    %v842 = vunpack.c.h.b16 %v639
    %v843 = vunpack.c.l.b16 %v640
    %v844 = vunpack.c.h.b16 %v640
    %v845 = vunpack.c.l.b16 %v641
    %v846 = vunpack.c.h.b16 %v641
    %v847 = vunpack.c.l.b16 %v642
    %v848 = vunpack.c.h.b16 %v642
    %v849 = vunpack.c.l.b16 %v643
    %v850 = vunpack.c.h.b16 %v643
    %v851 = vunpack.c.l.b16 %v644
    %v852 = vunpack.c.h.b16 %v644
    %v853 = vunpack.c.l.b16 %v645
    %v854 = vunpack.c.h.b16 %v645
    %v855 = vunpack.c.l.b16 %v646
    %v856 = vunpack.c.h.b16 %v646
    %v857 = vunpack.c.l.b16 %v647
    %v858 = vunpack.c.h.b16 %v647
    %v859 = vunpack.c.l.b16 %v648
    %v860 = vunpack.c.h.b16 %v648
    %v861 = vunpack.c.l.b16 %v649
    %v862 = vunpack.c.h.b16 %v649
    %v863 = vunpack.c.l.b16 %v650
    %v864 = vunpack.c.h.b16 %v650
    %v865 = vpack.c.b16 %v741, %v737
    %v866 = vpack.c.b16 %v742, %v738
    %v867 = vpack.c.b16 %v743, %v739
    %v868 = vpack.c.b16 %v744, %v740
    %v869 = vpack.c.b16 %v749, %v745
    %v870 = vpack.c.b16 %v750, %v746
    %v871 = vpack.c.b16 %v751, %v747
    %v872 = vpack.c.b16 %v752, %v748
    %v873 = vpack.c.b16 %v757, %v753
    %v874 = vpack.c.b16 %v758, %v754
    %v875 = vpack.c.b16 %v759, %v755
    %v876 = vpack.c.b16 %v760, %v756
    %v877 = vpack.c.b16 %v765, %v761
    %v878 = vpack.c.b16 %v766, %v762
    %v879 = vpack.c.b16 %v767, %v763
    %v880 = vpack.c.b16 %v768, %v764
    %v881 = vpack.c.b16 %v773, %v769
    %v882 = vpack.c.b16 %v774, %v770
    %v883 = vpack.c.b16 %v775, %v771
    %v884 = vpack.c.b16 %v776, %v772
    %v885 = vpack.c.b16 %v781, %v777
    %v886 = vpack.c.b16 %v782, %v778
    %v887 = vpack.c.b16 %v783, %v779
    %v888 = vpack.c.b16 %v784, %v780
    %v889 = vpack.c.b16 %v789, %v785
    %v890 = vpack.c.b16 %v790, %v786
    %v891 = vpack.c.b16 %v791, %v787
    %v892 = vpack.c.b16 %v792, %v788
    %v893 = vpack.c.b16 %v797, %v793
    %v894 = vpack.c.b16 %v798, %v794
    %v895 = vpack.c.b16 %v799, %v795
    %v896 = vpack.c.b16 %v800, %v796
    %v897 = vpack.c.b16 %v805, %v801
    %v898 = vpack.c.b16 %v806, %v802
    %v899 = vpack.c.b16 %v807, %v803
    %v900 = vpack.c.b16 %v808, %v804
    %v901 = vpack.c.b16 %v813, %v809
    %v902 = vpack.c.b16 %v814, %v810
    %v903 = vpack.c.b16 %v815, %v811
    %v904 = vpack.c.b16 %v816, %v812
    %v905 = vpack.c.b16 %v821, %v817
    %v906 = vpack.c.b16 %v822, %v818
    %v907 = vpack.c.b16 %v823, %v819
    %v908 = vpack.c.b16 %v824, %v820
    %v909 = vpack.c.b16 %v829, %v825
    %v910 = vpack.c.b16 %v830, %v826
    %v911 = vpack.c.b16 %v831, %v827
    %v912 = vpack.c.b16 %v832, %v828
    %v913 = vpack.c.b16 %v837, %v833
    %v914 = vpack.c.b16 %v838, %v834
    %v915 = vpack.c.b16 %v839, %v835
    %v916 = vpack.c.b16 %v840, %v836
    %v917 = vpack.c.b16 %v845, %v841
    %v918 = vpack.c.b16 %v846, %v842
    %v919 = vpack.c.b16 %v847, %v843
    %v920 = vpack.c.b16 %v848, %v844
    %v921 = vpack.c.b16 %v853, %v849
    %v922 = vpack.c.b16 %v854, %v850
    %v923 = vpack.c.b16 %v855, %v851
    %v924 = vpack.c.b16 %v856, %v852
    %v925 = vpack.c.b16 %v861, %v857
    %v926 = vpack.c.b16 %v862, %v858
    %v927 = vpack.c.b16 %v863, %v859
    %v928 = vpack.c.b16 %v864, %v860
    %993 = vmatprep.subr.bf16.mxu0 %v894
    %994 = vmatpush1.bf16.msra.mxu0 %v893
    %995 = vmatprep.subr.bf16.mxu0 %v890
    %996 = vmatpush1.bf16.msra.mxu0 %v889
    %997 = vmatprep.subr.bf16.mxu0 %v886
    %998 = vmatpush1.bf16.msra.mxu0 %v885
    %999 = vmatprep.subr.bf16.mxu0 %v882
    %1000 = vmatpush1.bf16.msra.mxu0 %v881
    %1001 = vmatprep.subr.bf16.mxu0 %v878
    %1002 = vmatpush1.bf16.msra.mxu0 %v877
    %1003 = vmatprep.subr.bf16.mxu0 %v874
    %1004 = vmatpush1.bf16.msra.mxu0 %v873
    %1005 = vmatprep.subr.bf16.mxu0 %v870
    %1006 = vmatpush1.bf16.msra.mxu0 %v869
    %1007 = vmatprep.subr.bf16.mxu0 %v866
    %1008 = vmatpush1.bf16.msra.mxu0 %v865
    %1009 = vmatprep.subr.bf16.mxu0 %v926
    %1010 = vmatpush2.bf16.msra.mxu0 %v925
    %1011 = vmatprep.subr.bf16.mxu0 %v922
    %1012 = vmatpush2.bf16.msra.mxu0 %v921
    %1013 = vmatprep.subr.bf16.mxu0 %v918
    %1014 = vmatpush2.bf16.msra.mxu0 %v917
    %1015 = vmatprep.subr.bf16.mxu0 %v914
    %1016 = vmatpush2.bf16.msra.mxu0 %v913
    %1017 = vmatprep.subr.bf16.mxu0 %v910
    %1018 = vmatpush2.bf16.msra.mxu0 %v909
    %1019 = vmatprep.subr.bf16.mxu0 %v906
    %1020 = vmatpush2.bf16.msra.mxu0 %v905
    %1021 = vmatprep.subr.bf16.mxu0 %v902
    %1022 = vmatpush2.bf16.msra.mxu0 %v901
    %1023 = vmatprep.subr.bf16.mxu0 %v898
    %1024 = vmatpush2.bf16.msra.mxu0 %v897
    %1025 = vmatprep.mubr.bf16.mxu0 %v586
    %1026 = vmatmul.mubr.bf16.gmra.mxu0 %v585
    %v1027 = vpop.f32.mrf.mxu0
    %v1028 = vadd.f32 %v656, %v1027
    %v1029 = vpop.f32.mrf.mxu0
    %v1030 = vadd.f32 %v660, %v1029
    %v1031 = vpop.f32.mrf.mxu0
    %v1032 = vpop.f32.mrf.mxu0
    %1033 = vdwg.mxu0
    %1034 = vmatprep.subr.bf16.mxu0 %v896
    %1035 = vmatpush1.bf16.msra.mxu0 %v895
    %1036 = vmatprep.subr.bf16.mxu0 %v892
    %1037 = vmatpush1.bf16.msra.mxu0 %v891
    %1038 = vmatprep.subr.bf16.mxu0 %v888
    %1039 = vmatpush1.bf16.msra.mxu0 %v887
    %1040 = vmatprep.subr.bf16.mxu0 %v884
    %1041 = vmatpush1.bf16.msra.mxu0 %v883
    %1042 = vmatprep.subr.bf16.mxu0 %v880
    %1043 = vmatpush1.bf16.msra.mxu0 %v879
    %1044 = vmatprep.subr.bf16.mxu0 %v876
    %1045 = vmatpush1.bf16.msra.mxu0 %v875
    %1046 = vmatprep.subr.bf16.mxu0 %v872
    %1047 = vmatpush1.bf16.msra.mxu0 %v871
    %1048 = vmatprep.subr.bf16.mxu0 %v868
    %1049 = vmatpush1.bf16.msra.mxu0 %v867
    %1050 = vmatprep.subr.bf16.mxu0 %v928
    %1051 = vmatpush2.bf16.msra.mxu0 %v927
    %1052 = vmatprep.subr.bf16.mxu0 %v924
    %1053 = vmatpush2.bf16.msra.mxu0 %v923
    %1054 = vmatprep.subr.bf16.mxu0 %v920
    %1055 = vmatpush2.bf16.msra.mxu0 %v919
    %1056 = vmatprep.subr.bf16.mxu0 %v916
    %1057 = vmatpush2.bf16.msra.mxu0 %v915
    %1058 = vmatprep.subr.bf16.mxu0 %v912
    %1059 = vmatpush2.bf16.msra.mxu0 %v911
    %1060 = vmatprep.subr.bf16.mxu0 %v908
    %1061 = vmatpush2.bf16.msra.mxu0 %v907
    %1062 = vmatprep.subr.bf16.mxu0 %v904
    %1063 = vmatpush2.bf16.msra.mxu0 %v903
    %1064 = vmatprep.subr.bf16.mxu0 %v900
    %1065 = vmatpush2.bf16.msra.mxu0 %v899
    %1066 = vmatprep.mubr.bf16.mxu0 %v586
    %1067 = vmatmul.mubr.bf16.gmra.mxu0 %v585
    %v1068 = vpop.f32.mrf.mxu0
    %v1069 = vadd.f32 %v664, %v1068
    %v1070 = vpop.f32.mrf.mxu0
    %v1071 = vadd.f32 %v668, %v1070
    %v1072 = vpop.f32.mrf.mxu0
    %v1073 = vpop.f32.mrf.mxu0
    %1074 = vdwg.mxu0
    %v1075 = vxor.u32 %v1028, 2147483648
    %v1076 = vxor.u32 %v1030, 2147483648
    %v1077 = vxor.u32 %v1069, 2147483648
    %v1078 = vmul.f32 %v1075, 1.442695
    %v1079 = vpow.pop %v1078
    %v1080 = vmul.f32 %v1076, 1.442695
    %v1081 = vpow.pop %v1080
    %v1082 = vmul.f32 %v1077, 1.442695
    %v1083 = vpow.pop %v1082
    %v1084 = vadd.f32 %v1079, 1.0
    %v1085 = vadd.f32 %v1081, 1.0
    %v1086 = vadd.f32 %v1083, 1.0
    %v1087 = vrcp.pop %v1084
    %v1088 = vmul.f32 1.0, %v1087
    %v1089 = vrcp.pop %v1085
    %v1090 = vmul.f32 1.0, %v1089
    %v1091 = vrcp.pop %v1086
    %v1092 = vmul.f32 1.0, %v1091
    %v1093 = vtanh.pop %v1071
    %v1094 = vmul.f32 %v1090, %v584
    %v1095 = vmul.f32 %v1088, %v1093
    %v1096 = vadd.f32 %v1094, %v1095
    %v1097 = vtanh.pop %v1096
    %v1098 = vmul.f32 %v1092, %v1097
    %1099 = vst [vmem:[%s12] sm:$0xff] %v1096
    %1100 = vst [vmem:[%s11] sm:$0xff] %v1098
    // Predicated region
    $region46: #{multi_layer_lstm_cell_forward.1} parent=1 // pred_check
      _
    $region47: #{multi_layer_lstm_cell_forward.1} parent=1 // pred_check_branch
      %1102 = sbr.rel (0) target = $region49
    $region48: #{multi_layer_lstm_cell_forward.1} parent=1 // pred_region
      _
    $region49: #{multi_layer_lstm_cell_forward.1} parent=1 // pred_fallthru
      _
    // Predicated region
    $region50: #{multi_layer_lstm_cell_forward.1} parent=1 // pred_check
      _
    $region51: #{multi_layer_lstm_cell_forward.1} parent=1 // pred_check_branch
      %1104 = sbr.rel (0) target = $region53
    $region52: #{multi_layer_lstm_cell_forward.1} parent=1 // pred_region
      _
    $region53: #{multi_layer_lstm_cell_forward.1} parent=1 // pred_fallthru
      _
    // Predicated region
    $region54: #{multi_layer_lstm_cell_forward.1} parent=1 // pred_check
      _
    $region55: #{multi_layer_lstm_cell_forward.1} parent=1 // pred_check_branch
      %1106 = sbr.rel (0) target = $region57
    $region56: #{multi_layer_lstm_cell_forward.1} parent=1 // pred_region
      _
    $region57: #{multi_layer_lstm_cell_forward.1} parent=1 // pred_fallthru
      _
    // Predicated region
    $region58: #{multi_layer_lstm_cell_forward.1} parent=1 // pred_check
      _
    $region59: #{multi_layer_lstm_cell_forward.1} parent=1 // pred_check_branch
      %1108 = sbr.rel (0) target = $region61
    $region60: #{multi_layer_lstm_cell_forward.1} parent=1 // pred_region
      _
    $region61: #{multi_layer_lstm_cell_forward.1} parent=1 // pred_fallthru
      _
    // Predicated region
    $region62: #{multi_layer_lstm_cell_forward.1} parent=1 // pred_check
      _
    $region63: #{multi_layer_lstm_cell_forward.1} parent=1 // pred_check_branch
      %1110 = sbr.rel (0) target = $region65
    $region64: #{multi_layer_lstm_cell_forward.1} parent=1 // pred_region
      _
    $region65: #{multi_layer_lstm_cell_forward.1} parent=1 // pred_fallthru
      _
    // Predicated region
    $region66: #{multi_layer_lstm_cell_forward.1} parent=1 // pred_check
      _
    $region67: #{multi_layer_lstm_cell_forward.1} parent=1 // pred_check_branch
      %1112 = sbr.rel (0) target = $region69
    $region68: #{multi_layer_lstm_cell_forward.1} parent=1 // pred_region
      _
    $region69: #{multi_layer_lstm_cell_forward.1} parent=1 // pred_fallthru
      _
    // Predicated region
    $region70: #{multi_layer_lstm_cell_forward.1} parent=1 // pred_check
      _
    $region71: #{multi_layer_lstm_cell_forward.1} parent=1 // pred_check_branch
      %1114 = sbr.rel (0) target = $region73
    $region72: #{multi_layer_lstm_cell_forward.1} parent=1 // pred_region
      _
    $region73: #{multi_layer_lstm_cell_forward.1} parent=1 // pred_fallthru
      _
    // Predicated region
    $region74: #{multi_layer_lstm_cell_forward.1} parent=1 // pred_check
      _
    $region75: #{multi_layer_lstm_cell_forward.1} parent=1 // pred_check_branch
      %1116 = sbr.rel (0) target = $region77
    $region76: #{multi_layer_lstm_cell_forward.1} parent=1 // pred_region
      _
    $region77: #{multi_layer_lstm_cell_forward.1} parent=1 // pred_fallthru
      _
    %1117 = vsyncpa [#allocation3], 1
    %1118 = vsyncpa [#allocation5], 1

</llo_original>
